<compile_context>
chip_gen: v5e
topology: v5e:2x2
jax: 0.10.0
libtpu: 0.0.40
codegen_flags: <defaults>
</compile_context>

<pallas_src>
import functools
import math

import numpy as np
import jax
import jax.numpy as jnp
from jax import lax
from jax.experimental import pallas as pl
from jax.experimental.pallas import tpu as pltpu


# ---------------------------------------------------------------------------
# Pallas kernel: fused (conv1+BN1) -> leaky_relu(0.1) -> (conv2+BN2)
# on a batch-folded channels-last slab of shape (Bt*H, W*Cin), bf16 in,
# f32 accumulate, f32 out.
# ---------------------------------------------------------------------------
def _si_kernel(H, K, P, x_ref, m1_ref, b1_ref, m2_ref, b2_ref, o_ref):
    Mt = x_ref.shape[0]                          # Bt * H rows (static)
    x = x_ref[...]                               # (Mt, W*Cin) bf16

    # Row-validity masks for the H "same" padding halo (rows pulled across an
    # image boundary / slab edge contribute zero).  Built once, reused by
    # both convs.
    if K > 1:
        rid = lax.broadcasted_iota(jnp.int32, (Mt, 1), 0) % H
        masks = [jnp.logical_and(rid + (kh - P) >= 0, rid + (kh - P) < H)
                 for kh in range(K)]
    else:
        masks = [None]

    def shifted(a, s):
        # out[r, :] = a[r + s, :] (zeros shifted in at the slab edges).
        if s == 0:
            return a
        z = jnp.zeros((abs(s), a.shape[1]), a.dtype)
        if s > 0:
            return jnp.concatenate([a[s:, :], z], axis=0)
        return jnp.concatenate([z, a[:s, :]], axis=0)

    def im2col_rows(a):
        # (Mt, WC) bf16 -> (Mt, K*WC) bf16; interior image boundaries masked.
        if K == 1:
            return a
        parts = []
        for kh in range(K):                      # static unroll
            s = kh - P
            p = a if s == 0 else jnp.where(masks[kh], shifted(a, s), 0)
            parts.append(p)
        return jnp.concatenate(parts, axis=1)

    def conv(a, m_ref, b_ref):
        # Single fused matmul per conv: (Mt, K*WC) @ (K*WC, W*Cout) + bias.
        lhs = im2col_rows(a)
        return (jnp.dot(lhs, m_ref[...], preferred_element_type=jnp.float32)
                + b_ref[...])

    y1 = conv(x, m1_ref, b1_ref)                          # conv1 (+BN1 folded)
    h1 = jnp.where(y1 > 0, y1, 0.1 * y1)                  # leaky_relu(0.1), f32
    h1 = h1.astype(jnp.bfloat16)                          # cast once for conv2
    y2 = conv(h1, m2_ref, b2_ref)                         # conv2 (+BN2 folded)
    o_ref[...] = y2.astype(o_ref.dtype)                   # no final activation


# ---------------------------------------------------------------------------
# Parameter preprocessing (pure jnp -> jit/scan friendly, hoistable).
# ---------------------------------------------------------------------------
def _fold_bn(w, b, gamma, beta, mean, var, eps):
    # Fold inference-mode BatchNorm2d into the preceding conv (exact).
    scale = gamma * lax.rsqrt(var + eps)
    return w * scale[:, None, None, None], (b - mean) * scale + beta


def _band_matrices(w, W):
    # w: (Cout, Cin, K, K)  ->  (K*W*Cin, W*Cout) bf16 Toeplitz-along-W matrix
    # with edge-tap clipping (the "same" zero-padding in W is folded in).
    Cout, Cin, K, _ = w.shape
    P = (K - 1) // 2
    sel = np.zeros((K, W, W), np.float32)                # static selector
    for kw in range(K):
        for wo in range(W):
            wi = wo + kw - P
            if 0 <= wi < W:
                sel[kw, wi, wo] = 1.0
    # result index order: (kh, wi, ci, wo, co)
    m = jnp.einsum('kab,oihk->haibo', jnp.asarray(sel), w.astype(jnp.float32))
    return m.reshape(K * W * Cin, W * Cout).astype(jnp.bfloat16)


def prepare_params(params, W, eps=1e-5):
    """BN-fold + band-matrix build.  Call once per weight update and reuse."""
    w1, b1 = _fold_bn(params['conv1_w'], params['conv1_b'], params['bn1_g'],
                      params['bn1_b'], params['bn1_m'], params['bn1_v'], eps)
    w2, b2 = _fold_bn(params['conv2_w'], params['conv2_b'], params['bn2_g'],
                      params['bn2_b'], params['bn2_m'], params['bn2_v'], eps)
    Cout = w1.shape[0]
    m1 = _band_matrices(w1, W)
    m2 = _band_matrices(w2, W)
    b1v = jnp.tile(b1.astype(jnp.float32), W).reshape(1, W * Cout)
    b2v = jnp.tile(b2.astype(jnp.float32), W).reshape(1, W * Cout)
    return m1, b1v, m2, b2v


# ---------------------------------------------------------------------------
# Optional `upsize` branch of the module (in_channels > out_channels).
# TODO(synk): bilinear 2x upsample (align_corners=False) runs in plain JAX,
# not inside the Pallas kernel.
# ---------------------------------------------------------------------------
def _bilinear_upsample_2x(x):
    B, C, H, W = x.shape

    def taps(n):
        dst = np.arange(2 * n)
        src = (dst + 0.5) / 2.0 - 0.5
        lo = np.floor(src).astype(np.int32)
        frac = (src - lo).astype(np.float32)
        return (jnp.asarray(np.clip(lo, 0, n - 1)),
                jnp.asarray(np.clip(lo + 1, 0, n - 1)),
                jnp.asarray(frac))

    lo_h, hi_h, fh = taps(H)
    lo_w, hi_w, fw = taps(W)
    xh = (x[:, :, lo_h, :] * (1.0 - fh)[None, None, :, None]
          + x[:, :, hi_h, :] * fh[None, None, :, None])
    return xh[:, :, :, lo_w] * (1.0 - fw) + xh[:, :, :, hi_w] * fw


# ---------------------------------------------------------------------------
# Wrapper: layout plumbing + pallas_call.
# ---------------------------------------------------------------------------
def _pallas_conv_stack(x_slab, m1, b1v, m2, b2v, H, K):
    # x_slab: (B, H, W*Cin) f32 channels-last slab.
    B, _, WCin = x_slab.shape
    WCout = m1.shape[1]
    P = (K - 1) // 2

    # Batch tile: aim for ~512 matmul rows per grid step (MXU row occupancy /
    # pipeline-overhead amortization), keep Bt*H aligned to the bf16 sublane
    # quantum (16), and cap the tile so VMEM stays bounded on every TPU
    # generation (v7x has only 64 MiB).
    SUBLANE = 16
    TARGET_M, MAX_M = 512, 1024
    step = SUBLANE // math.gcd(H, SUBLANE)       # smallest aligned Bt increment
    bt = max(1, min(B, TARGET_M // H))
    bt = -(-bt // step) * step                   # round UP to alignment
    cap = max(step, (MAX_M // (H * step)) * step)
    Bt = min(bt, cap)

    G = -(-B // Bt)
    B_pad = G * Bt

    x_slab = x_slab.astype(jnp.bfloat16)         # bf16 stream into the kernel
    if B_pad != B:
        pad = jnp.zeros((B_pad - B, H, WCin), jnp.bfloat16)
        x_slab = jnp.concatenate([x_slab, pad], axis=0)
    x2d = x_slab.reshape(B_pad * H, WCin)
    Mt = Bt * H

    kernel = functools.partial(_si_kernel, H, K, P)
    out = pl.pallas_call(
        kernel,
        out_shape=jax.ShapeDtypeStruct((B_pad * H, WCout), jnp.float32),
        grid_spec=pltpu.PrefetchScalarGridSpec(
            num_scalar_prefetch=0,
            grid=(G,),
            in_specs=[
                pl.BlockSpec((Mt, WCin), lambda i: (i, 0)),         # activations
                pl.BlockSpec(m1.shape, lambda i: (0, 0)),           # conv1 band mat
                pl.BlockSpec((1, WCout), lambda i: (0, 0)),         # conv1+BN1 bias
                pl.BlockSpec(m2.shape, lambda i: (0, 0)),           # conv2 band mat
                pl.BlockSpec((1, WCout), lambda i: (0, 0)),         # conv2+BN2 bias
            ],
            out_specs=pl.BlockSpec((Mt, WCout), lambda i: (i, 0)),
        ),
        compiler_params=pltpu.CompilerParams(
            dimension_semantics=("parallel",),
            vmem_limit_bytes=32 * 1024 * 1024,
        ),
    )(x2d, m1, b1v, m2, b2v)
    return out[:B * H]


def state_initializer_forward(x_nchw, params, eps=1e-5):
    """Forward pass of `state_initializer` (inference-mode BatchNorm)."""
    w1 = params['conv1_w']
    Cout, Cin, K, _ = w1.shape
    assert K % 2 == 1, "odd filterSize expected (same-padding conv)"
    if Cin > Cout:                               # self.upsize
        x_nchw = _bilinear_upsample_2x(x_nchw)
    B, _, H, W = x_nchw.shape
    m1, b1v, m2, b2v = prepare_params(params, W, eps)
    x_slab = jnp.transpose(x_nchw, (0, 2, 3, 1)).reshape(B, H, W * Cin)
    out2d = _pallas_conv_stack(x_slab, m1, b1v, m2, b2v, H, K)
    return jnp.transpose(out2d.reshape(B, H, W, Cout), (0, 3, 1, 2))


# ---------------------------------------------------------------------------
# Pure-JAX reference (independent of the folding / Toeplitz path).
# ---------------------------------------------------------------------------
def state_initializer_reference(x, params, eps=1e-5):
    w1 = params['conv1_w']
    Cout, Cin, _, _ = w1.shape
    if Cin > Cout:
        x = _bilinear_upsample_2x(x)

    def conv(h, w, b):
        P = (w.shape[2] - 1) // 2
        y = lax.conv_general_dilated(h, w, (1, 1), [(P, P), (P, P)],
                                     dimension_numbers=('NCHW', 'OIHW', 'NCHW'))
        return y + b[None, :, None, None]

    def bn(h, g, be, m, v):
        s = (g * lax.rsqrt(v + eps))[None, :, None, None]
        return (h - m[None, :, None, None]) * s + be[None, :, None, None]

    y = conv(x, params['conv1_w'], params['conv1_b'])
    y = bn(y, params['bn1_g'], params['bn1_b'], params['bn1_m'], params['bn1_v'])
    y = jnp.where(y > 0, y, 0.1 * y)
    y = conv(y, params['conv2_w'], params['conv2_b'])
    y = bn(y, params['bn2_g'], params['bn2_b'], params['bn2_m'], params['bn2_v'])
    return y


def _make_params(key, Cin, Cout, K):
    ks = jax.random.split(key, 12)
    fan1, fan2 = Cin * K * K, Cout * K * K
    u = lambda k, shape, lo, hi: jax.random.uniform(k, shape, jnp.float32, lo, hi)
    return {
        'conv1_w': u(ks[0], (Cout, Cin, K, K), -1.0, 1.0) / np.sqrt(fan1),
        'conv1_b': u(ks[1], (Cout,), -1.0, 1.0) / np.sqrt(fan1),
        'conv2_w': u(ks[2], (Cout, Cout, K, K), -1.0, 1.0) / np.sqrt(fan2),
        'conv2_b': u(ks[3], (Cout,), -1.0, 1.0) / np.sqrt(fan2),
        'bn1_g': u(ks[4], (Cout,), 0.5, 1.5),
        'bn1_b': u(ks[5], (Cout,), -0.5, 0.5),
        'bn1_m': u(ks[6], (Cout,), -0.2, 0.2),
        'bn1_v': u(ks[7], (Cout,), 0.5, 1.5),
        'bn2_g': u(ks[8], (Cout,), 0.5, 1.5),
        'bn2_b': u(ks[9], (Cout,), -0.5, 0.5),
        'bn2_m': u(ks[10], (Cout,), -0.2, 0.2),
        'bn2_v': u(ks[11], (Cout,), 0.5, 1.5),
    }


if __name__ == "__main__":
    key = jax.random.PRNGKey(0)
    fwd = jax.jit(state_initializer_forward)

    configs = [
        # (B, Cin, Cout, K, H, W)
        (2, 4, 8, 3, 16, 16),     # main config (no upsize)
        (2, 4, 8, 1, 16, 16),     # module default filterSize=1
        (2, 8, 4, 3, 8, 8),       # upsize branch (JAX bilinear + Pallas convs)
    ]
    for (B, Cin, Cout, K, H, W) in configs:
        kx, kp, key = jax.random.split(key, 3)
        x = jax.random.normal(kx, (B, Cin, H, W), jnp.float32)
        params = _make_params(kp, Cin, Cout, K)

        out = jax.block_until_ready(fwd(x, params))
        ref = state_initializer_reference(x, params)
        # bf16 MXU operands / bf16 activation stream with f32 accumulation
        # -> relaxed tolerance.
        np.testing.assert_allclose(np.asarray(out), np.asarray(ref),
                                   rtol=2e-2, atol=2e-2)

    print("KERNEL_OK")
</pallas_src>

<mosaic_0001>
module attributes {stable_mosaic.version = 11 : i64} {
  func.func @_si_kernel(%arg0: i32, %arg1: memref<32x64xbf16, #tpu.memory_space<vmem>>, %arg2: memref<192x128xbf16, #tpu.memory_space<vmem>>, %arg3: memref<1x128xf32, #tpu.memory_space<vmem>>, %arg4: memref<384x128xbf16, #tpu.memory_space<vmem>>, %arg5: memref<1x128xf32, #tpu.memory_space<vmem>>, %arg6: memref<32x128xf32, #tpu.memory_space<vmem>>) attributes {dimension_semantics = [#tpu.dimension_semantics<parallel>], iteration_bounds = array<i64: 1>, scalar_prefetch = 0 : i64, scratch_operands = 0 : i64, tpu.core_type = #tpu.core_type<tc>, window_params = [{transform_indices = @transform_0, window_bounds = array<i64: 32, 64>}, {pipeline_mode = #tpu.pipeline_mode<synchronous>, transform_indices = @transform_1, window_bounds = array<i64: 192, 128>}, {pipeline_mode = #tpu.pipeline_mode<synchronous>, transform_indices = @transform_2, window_bounds = array<i64: 1, 128>}, {pipeline_mode = #tpu.pipeline_mode<synchronous>, transform_indices = @transform_3, window_bounds = array<i64: 384, 128>}, {pipeline_mode = #tpu.pipeline_mode<synchronous>, transform_indices = @transform_4, window_bounds = array<i64: 1, 128>}, {transform_indices = @transform_5, window_bounds = array<i64: 32, 128>}]} {
    %c0 = arith.constant 0 : index
    %c0_0 = arith.constant 0 : index
    %0 = vector.load %arg1[%c0, %c0_0] : memref<32x64xbf16, #tpu.memory_space<vmem>>, vector<32x64xbf16>
    %1 = tpu.iota {dimensions = array<i32: 0>} : vector<32x1xi32>
    %c16_i32 = arith.constant 16 : i32
    %c0_i32 = arith.constant 0 : i32
    %2 = arith.cmpi eq, %c16_i32, %c0_i32 : i32
    %c1_i32 = arith.constant 1 : i32
    %3 = arith.select %2, %c1_i32, %c16_i32 : i32
    %4 = vector.broadcast %3 : i32 to vector<32x1xi32>
    %5 = arith.remsi %1, %4 : vector<32x1xi32>
    %c0_i32_1 = arith.constant 0 : i32
    %6 = vector.broadcast %c0_i32_1 : i32 to vector<32x1xi32>
    %7 = arith.cmpi ne, %5, %6 : vector<32x1xi32>
    %c0_i32_2 = arith.constant 0 : i32
    %8 = vector.broadcast %c0_i32_2 : i32 to vector<32x1xi32>
    %9 = arith.cmpi slt, %5, %8 : vector<32x1xi32>
    %c0_i32_3 = arith.constant 0 : i32
    %10 = arith.cmpi slt, %3, %c0_i32_3 : i32
    %11 = vector.broadcast %10 : i1 to vector<32x1xi1>
    %12 = vector.broadcast %11 : vector<32x1xi1> to vector<32x1xi1>
    %13 = arith.xori %9, %12 : vector<32x1xi1>
    %14 = arith.andi %13, %7 : vector<32x1xi1>
    %15 = vector.broadcast %3 : i32 to vector<32x1xi32>
    %16 = arith.addi %5, %15 : vector<32x1xi32>
    %17 = arith.select %14, %16, %5 : vector<32x1xi1>, vector<32x1xi32>
    %c-1_i32 = arith.constant -1 : i32
    %18 = vector.broadcast %c-1_i32 : i32 to vector<32x1xi32>
    %19 = arith.addi %17, %18 : vector<32x1xi32>
    %c0_i32_4 = arith.constant 0 : i32
    %20 = vector.broadcast %c0_i32_4 : i32 to vector<32x1xi32>
    %21 = arith.cmpi sge, %19, %20 : vector<32x1xi32>
    %c-1_i32_5 = arith.constant -1 : i32
    %22 = vector.broadcast %c-1_i32_5 : i32 to vector<32x1xi32>
    %23 = arith.addi %17, %22 : vector<32x1xi32>
    %c16_i32_6 = arith.constant 16 : i32
    %24 = vector.broadcast %c16_i32_6 : i32 to vector<32x1xi32>
    %25 = arith.cmpi slt, %23, %24 : vector<32x1xi32>
    %26 = arith.andi %21, %25 : vector<32x1xi1>
    %c1_i32_7 = arith.constant 1 : i32
    %27 = vector.broadcast %c1_i32_7 : i32 to vector<32x1xi32>
    %28 = arith.addi %17, %27 : vector<32x1xi32>
    %c0_i32_8 = arith.constant 0 : i32
    %29 = vector.broadcast %c0_i32_8 : i32 to vector<32x1xi32>
    %30 = arith.cmpi sge, %28, %29 : vector<32x1xi32>
    %c1_i32_9 = arith.constant 1 : i32
    %31 = vector.broadcast %c1_i32_9 : i32 to vector<32x1xi32>
    %32 = arith.addi %17, %31 : vector<32x1xi32>
    %c16_i32_10 = arith.constant 16 : i32
    %33 = vector.broadcast %c16_i32_10 : i32 to vector<32x1xi32>
    %34 = arith.cmpi slt, %32, %33 : vector<32x1xi32>
    %35 = arith.andi %30, %34 : vector<32x1xi1>
    %cst = arith.constant 0.000000e+00 : bf16
    %36 = vector.broadcast %cst : bf16 to vector<1x64xbf16>
    %37 = vector.extract_strided_slice %0 {offsets = [0, 0], sizes = [31, 64], strides = [1, 1]} : vector<32x64xbf16> to vector<31x64xbf16>
    %38 = tpu.concatenate %36, %37 in 0 : vector<1x64xbf16>, vector<31x64xbf16> -> vector<32x64xbf16>
    %c0_i32_11 = arith.constant 0 : i32
    %39 = arith.sitofp %c0_i32_11 : i32 to bf16
    %40 = vector.shape_cast %26 : vector<32x1xi1> to vector<32x1xi1>
    %41 = vector.broadcast %40 : vector<32x1xi1> to vector<32x64xi1>
    %42 = vector.broadcast %39 : bf16 to vector<32x64xbf16>
    %43 = arith.select %41, %38, %42 : vector<32x64xi1>, vector<32x64xbf16>
    %cst_12 = arith.constant 0.000000e+00 : bf16
    %44 = vector.broadcast %cst_12 : bf16 to vector<1x64xbf16>
    %45 = vector.extract_strided_slice %0 {offsets = [1, 0], sizes = [31, 64], strides = [1, 1]} : vector<32x64xbf16> to vector<31x64xbf16>
    %46 = tpu.concatenate %45, %44 in 0 : vector<31x64xbf16>, vector<1x64xbf16> -> vector<32x64xbf16>
    %c0_i32_13 = arith.constant 0 : i32
    %47 = arith.sitofp %c0_i32_13 : i32 to bf16
    %48 = vector.shape_cast %35 : vector<32x1xi1> to vector<32x1xi1>
    %49 = vector.broadcast %48 : vector<32x1xi1> to vector<32x64xi1>
    %50 = vector.broadcast %47 : bf16 to vector<32x64xbf16>
    %51 = arith.select %49, %46, %50 : vector<32x64xi1>, vector<32x64xbf16>
    %52 = tpu.concatenate %43, %0, %51 in 1 : vector<32x64xbf16>, vector<32x64xbf16>, vector<32x64xbf16> -> vector<32x192xbf16>
    %c0_14 = arith.constant 0 : index
    %c0_15 = arith.constant 0 : index
    %53 = vector.load %arg2[%c0_14, %c0_15] : memref<192x128xbf16, #tpu.memory_space<vmem>>, vector<192x128xbf16>
    %cst_16 = arith.constant dense<0.000000e+00> : vector<32x128xf32>
    %54 = tpu.matmul %52, %53, %cst_16 {dimension_numbers = #tpu.dot_dimension_numbers<[1], [0], [0], [1], [0, 0, 1, 1], [], []>} : vector<32x192xbf16>, vector<192x128xbf16>, vector<32x128xf32> -> vector<32x128xf32>
    %c0_17 = arith.constant 0 : index
    %c0_18 = arith.constant 0 : index
    %55 = vector.load %arg3[%c0_17, %c0_18] : memref<1x128xf32, #tpu.memory_space<vmem>>, vector<1x128xf32>
    %56 = vector.broadcast %55 : vector<1x128xf32> to vector<32x128xf32>
    %57 = arith.addf %54, %56 : vector<32x128xf32>
    %cst_19 = arith.constant 0.000000e+00 : f32
    %58 = vector.broadcast %cst_19 : f32 to vector<32x128xf32>
    %59 = arith.cmpf ogt, %57, %58 : vector<32x128xf32>
    %cst_20 = arith.constant 1.000000e-01 : f32
    %60 = vector.broadcast %cst_20 : f32 to vector<32x128xf32>
    %61 = arith.mulf %60, %57 : vector<32x128xf32>
    %62 = arith.select %59, %57, %61 : vector<32x128xi1>, vector<32x128xf32>
    %63 = arith.truncf %62 : vector<32x128xf32> to vector<32x128xbf16>
    %cst_21 = arith.constant 0.000000e+00 : bf16
    %64 = vector.broadcast %cst_21 : bf16 to vector<1x128xbf16>
    %65 = vector.extract_strided_slice %63 {offsets = [0, 0], sizes = [31, 128], strides = [1, 1]} : vector<32x128xbf16> to vector<31x128xbf16>
    %66 = tpu.concatenate %64, %65 in 0 : vector<1x128xbf16>, vector<31x128xbf16> -> vector<32x128xbf16>
    %c0_i32_22 = arith.constant 0 : i32
    %67 = arith.sitofp %c0_i32_22 : i32 to bf16
    %68 = vector.shape_cast %26 : vector<32x1xi1> to vector<32x1xi1>
    %69 = vector.broadcast %68 : vector<32x1xi1> to vector<32x128xi1>
    %70 = vector.broadcast %67 : bf16 to vector<32x128xbf16>
    %71 = arith.select %69, %66, %70 : vector<32x128xi1>, vector<32x128xbf16>
    %cst_23 = arith.constant 0.000000e+00 : bf16
    %72 = vector.broadcast %cst_23 : bf16 to vector<1x128xbf16>
    %73 = vector.extract_strided_slice %63 {offsets = [1, 0], sizes = [31, 128], strides = [1, 1]} : vector<32x128xbf16> to vector<31x128xbf16>
    %74 = tpu.concatenate %73, %72 in 0 : vector<31x128xbf16>, vector<1x128xbf16> -> vector<32x128xbf16>
    %c0_i32_24 = arith.constant 0 : i32
    %75 = arith.sitofp %c0_i32_24 : i32 to bf16
    %76 = vector.shape_cast %35 : vector<32x1xi1> to vector<32x1xi1>
    %77 = vector.broadcast %76 : vector<32x1xi1> to vector<32x128xi1>
    %78 = vector.broadcast %75 : bf16 to vector<32x128xbf16>
    %79 = arith.select %77, %74, %78 : vector<32x128xi1>, vector<32x128xbf16>
    %80 = tpu.concatenate %71, %63, %79 in 1 : vector<32x128xbf16>, vector<32x128xbf16>, vector<32x128xbf16> -> vector<32x384xbf16>
    %c0_25 = arith.constant 0 : index
    %c0_26 = arith.constant 0 : index
    %81 = vector.load %arg4[%c0_25, %c0_26] : memref<384x128xbf16, #tpu.memory_space<vmem>>, vector<384x128xbf16>
    %cst_27 = arith.constant dense<0.000000e+00> : vector<32x128xf32>
    %82 = tpu.matmul %80, %81, %cst_27 {dimension_numbers = #tpu.dot_dimension_numbers<[1], [0], [0], [1], [0, 0, 1, 1], [], []>} : vector<32x384xbf16>, vector<384x128xbf16>, vector<32x128xf32> -> vector<32x128xf32>
    %c0_28 = arith.constant 0 : index
    %c0_29 = arith.constant 0 : index
    %83 = vector.load %arg5[%c0_28, %c0_29] : memref<1x128xf32, #tpu.memory_space<vmem>>, vector<1x128xf32>
    %84 = vector.broadcast %83 : vector<1x128xf32> to vector<32x128xf32>
    %85 = arith.addf %82, %84 : vector<32x128xf32>
    %c0_30 = arith.constant 0 : index
    %c0_31 = arith.constant 0 : index
    %86 = vector.load %arg6[%c0_30, %c0_31] : memref<32x128xf32, #tpu.memory_space<vmem>>, vector<32x128xf32>
    tpu.vector_store %arg6[%c0_30, %c0_31], %85 {strides = array<i32>} : memref<32x128xf32, #tpu.memory_space<vmem>>, vector<32x128xf32>,
    return
  }
  func.func @transform_0(%arg0: i32) -> (i32, i32) {
    %c0_i32 = arith.constant 0 : i32
    %c0_i32_0 = arith.constant 0 : i32
    return %arg0, %c0_i32 : i32, i32
  }
  func.func @transform_1(%arg0: i32) -> (i32, i32) {
    %c0_i32 = arith.constant 0 : i32
    %c0_i32_0 = arith.constant 0 : i32
    %c0_i32_1 = arith.constant 0 : i32
    return %c0_i32, %c0_i32_0 : i32, i32
  }
  func.func @transform_2(%arg0: i32) -> (i32, i32) {
    %c0_i32 = arith.constant 0 : i32
    %c0_i32_0 = arith.constant 0 : i32
    %c0_i32_1 = arith.constant 0 : i32
    return %c0_i32, %c0_i32_0 : i32, i32
  }
  func.func @transform_3(%arg0: i32) -> (i32, i32) {
    %c0_i32 = arith.constant 0 : i32
    %c0_i32_0 = arith.constant 0 : i32
    %c0_i32_1 = arith.constant 0 : i32
    return %c0_i32, %c0_i32_0 : i32, i32
  }
  func.func @transform_4(%arg0: i32) -> (i32, i32) {
    %c0_i32 = arith.constant 0 : i32
    %c0_i32_0 = arith.constant 0 : i32
    %c0_i32_1 = arith.constant 0 : i32
    return %c0_i32, %c0_i32_0 : i32, i32
  }
  func.func @transform_5(%arg0: i32) -> (i32, i32) {
    %c0_i32 = arith.constant 0 : i32
    %c0_i32_0 = arith.constant 0 : i32
    return %arg0, %c0_i32 : i32, i32
  }
}

</mosaic_0001>

<llo_original>
// kernel: tile.13
$region0: #{tile.13}
  #allocation0 [shape = 's32[1]{0}', space=sflag, size = 0x4, scoped, tag = 'scoped memory for tile.13']
  %s0 = inlined_call_operand.vmem [shape: f32[8], index: 0, kind: input, shape index: {}]
  %s1 = inlined_call_operand.vmem [shape: f32[16,8], index: 1, kind: output, shape index: {}]
  // Predicated region
  $region2: #{tile.13} parent=0 // pred_check
    _
  $region3: #{tile.13} parent=0 // pred_check_branch
    %3 = sbr.rel (0) target = $region5
  $region4: #{tile.13} parent=0 // pred_region
    _
  $region5: #{tile.13} parent=0 // pred_fallthru
    _
  %v4 = vld [vmem:[%s0] ss:$0 sm:$0xff]
  %5 = vst [vmem:[%s1] sm:$0xff] %v4
  %s6 = scalar_lea.vmem %s1, 8
  %7 = vst [vmem:[%s6] sm:$0xff] %v4

// kernel: tile.14
$region0: #{tile.14}
  %s0 = inlined_call_operand.vmem [shape: f32[16,8], index: 0, kind: input, shape index: {}]
  %s1 = inlined_call_operand.vmem [shape: f32[1,128], index: 1, kind: output, shape index: {}]
  $region1: #{tile.14} parent=0
    #allocation0 [shape = 'u8[4096]{0}', space=vmem, size = 0x1000, scoped, tag = 'scoped mem for output reshape']
    %v2 = vld [vmem:[%s0] sm:$0x1]
    %vm3 = vcmask 64512
    %4 = vst.msk [vmem:[#allocation0] sm:$0x1] %vm3, %v2
    %s5 = scalar_lea.vmem %s0, 15
    %v6 = vld [vmem:[%s5] sm:$0x1]
    %7 = vrot.lane.b32.xlu0 %v6, 120
    %v8 = vpop.permute.xlu0 %7
    %vm9 = vcmask 1048512
    %10 = vst.msk [vmem:[#allocation0] sm:$0x1] %vm9, %v8
    %s11 = scalar_lea.vmem %s0, 14
    %v12 = vld [vmem:[%s11] sm:$0x1]
    %13 = vrot.lane.b32.xlu0 %v12, 112
    %v14 = vpop.permute.xlu0 %13
    %vm15 = vcmask 982912
    %16 = vst.msk [vmem:[#allocation0] sm:$0x1] %vm15, %v14
    %s17 = scalar_lea.vmem %s0, 13
    %v18 = vld [vmem:[%s17] sm:$0x1]
    %19 = vrot.lane.b32.xlu0 %v18, 104
    %v20 = vpop.permute.xlu0 %19
    %vm21 = vcmask 917312
    %22 = vst.msk [vmem:[#allocation0] sm:$0x1] %vm21, %v20
    %s23 = scalar_lea.vmem %s0, 12
    %v24 = vld [vmem:[%s23] sm:$0x1]
    %25 = vrot.lane.b32.xlu0 %v24, 96
    %v26 = vpop.permute.xlu0 %25
    %vm27 = vcmask 851712
    %28 = vst.msk [vmem:[#allocation0] sm:$0x1] %vm27, %v26
    %s29 = scalar_lea.vmem %s0, 11
    %v30 = vld [vmem:[%s29] sm:$0x1]
    %31 = vrot.lane.b32.xlu0 %v30, 88
    %v32 = vpop.permute.xlu0 %31
    %vm33 = vcmask 786112
    %34 = vst.msk [vmem:[#allocation0] sm:$0x1] %vm33, %v32
    %s35 = scalar_lea.vmem %s0, 10
    %v36 = vld [vmem:[%s35] sm:$0x1]
    %37 = vrot.lane.b32.xlu0 %v36, 80
    %v38 = vpop.permute.xlu0 %37
    %vm39 = vcmask 720512
    %40 = vst.msk [vmem:[#allocation0] sm:$0x1] %vm39, %v38
    %s41 = scalar_lea.vmem %s0, 9
    %v42 = vld [vmem:[%s41] sm:$0x1]
    %43 = vrot.lane.b32.xlu0 %v42, 72
    %v44 = vpop.permute.xlu0 %43
    %vm45 = vcmask 654912
    %46 = vst.msk [vmem:[#allocation0] sm:$0x1] %vm45, %v44
    %s47 = scalar_lea.vmem %s0, 8
    %v48 = vld [vmem:[%s47] sm:$0x1]
    %49 = vrot.lane.b32.xlu0 %v48, 64
    %v50 = vpop.permute.xlu0 %49
    %vm51 = vcmask 589312
    %52 = vst.msk [vmem:[#allocation0] sm:$0x1] %vm51, %v50
    %s53 = scalar_lea.vmem %s0, 7
    %v54 = vld [vmem:[%s53] sm:$0x1]
    %55 = vrot.lane.b32.xlu0 %v54, 56
    %v56 = vpop.permute.xlu0 %55
    %vm57 = vcmask 523712
    %58 = vst.msk [vmem:[#allocation0] sm:$0x1] %vm57, %v56
    %s59 = scalar_lea.vmem %s0, 6
    %v60 = vld [vmem:[%s59] sm:$0x1]
    %61 = vrot.lane.b32.xlu0 %v60, 48
    %v62 = vpop.permute.xlu0 %61
    %vm63 = vcmask 458112
    %64 = vst.msk [vmem:[#allocation0] sm:$0x1] %vm63, %v62
    %s65 = scalar_lea.vmem %s0, 5
    %v66 = vld [vmem:[%s65] sm:$0x1]
    %67 = vrot.lane.b32.xlu0 %v66, 40
    %v68 = vpop.permute.xlu0 %67
    %vm69 = vcmask 392512
    %70 = vst.msk [vmem:[#allocation0] sm:$0x1] %vm69, %v68
    %s71 = scalar_lea.vmem %s0, 4
    %v72 = vld [vmem:[%s71] sm:$0x1]
    %73 = vrot.lane.b32.xlu0 %v72, 32
    %v74 = vpop.permute.xlu0 %73
    %vm75 = vcmask 326912
    %76 = vst.msk [vmem:[#allocation0] sm:$0x1] %vm75, %v74
    %s77 = scalar_lea.vmem %s0, 3
    %v78 = vld [vmem:[%s77] sm:$0x1]
    %79 = vrot.lane.b32.xlu0 %v78, 24
    %v80 = vpop.permute.xlu0 %79
    %vm81 = vcmask 261312
    %82 = vst.msk [vmem:[#allocation0] sm:$0x1] %vm81, %v80
    %s83 = scalar_lea.vmem %s0, 2
    %v84 = vld [vmem:[%s83] sm:$0x1]
    %85 = vrot.lane.b32.xlu0 %v84, 16
    %v86 = vpop.permute.xlu0 %85
    %vm87 = vcmask 195712
    %88 = vst.msk [vmem:[#allocation0] sm:$0x1] %vm87, %v86
    %s89 = scalar_lea.vmem %s0, 1
    %v90 = vld [vmem:[%s89] sm:$0x1]
    %91 = vrot.lane.b32.xlu0 %v90, 8
    %v92 = vpop.permute.xlu0 %91
    %vm93 = vcmask 130112
    %94 = vst.msk [vmem:[#allocation0] sm:$0x1] %vm93, %v92
    %s96 = ssub.s32 2, 1
    %v97 = vld [vmem:[#allocation0] sm:%s96]
    %s99 = ssub.s32 2, 1
    %100 = vst [vmem:[%s1] sm:%s99] %v97

// kernel: state_initializer_forward.1
$region0: #{state_initializer_forward.1}
  #allocation0 [shape = 'u32[]', space=smem, size = 0x4, offset = 0x4, fixed_abs, tag = 'smem constant byte address 0x4 - core index']
  #allocation1 [shape = 'u32[72,128]{1,0:T(1,128)}', space=vmem, size = 0x9000, scoped, tag = 'internal scratch']
  %s0 = inlined_call_operand.vmem [shape: bf16[32,64], index: 0, kind: input, shape index: {}]
  %s1 = inlined_call_operand.vmem [shape: bf16[192,128], index: 1, kind: input, shape index: {}]
  %s2 = inlined_call_operand.vmem [shape: f32[1,128], index: 2, kind: input, shape index: {}]
  %s3 = inlined_call_operand.vmem [shape: bf16[384,128], index: 3, kind: input, shape index: {}]
  %s4 = inlined_call_operand.vmem [shape: f32[1,128], index: 4, kind: input, shape index: {}]
  %s5 = inlined_call_operand.vmem [shape: f32[32,128], index: 5, kind: output, shape index: {}]
  %s6 = sld [smem:[#allocation0]]
  $region30: #{state_initializer_forward.1} parent=0
    _
  %s8 = ssub.s32 1, %s6
  %s9 = scalar_select 0, %s8, %s6
  // Predicated region
  $region2: #{state_initializer_forward.1} parent=0 // pred_check
    _
  $region3: #{state_initializer_forward.1} parent=0 // pred_check_branch
    %11 = sbr.rel (0) target = $region5
  $region4: #{state_initializer_forward.1} parent=0 // pred_region
    _
  $region5: #{state_initializer_forward.1} parent=0 // pred_fallthru
    _
  // Predicated region
  $region6: #{state_initializer_forward.1} parent=0 // pred_check
    _
  $region7: #{state_initializer_forward.1} parent=0 // pred_check_branch
    %13 = sbr.rel (0) target = $region9
  $region8: #{state_initializer_forward.1} parent=0 // pred_region
    _
  $region9: #{state_initializer_forward.1} parent=0 // pred_fallthru
    _
  // Predicated region
  $region10: #{state_initializer_forward.1} parent=0 // pred_check
    _
  $region11: #{state_initializer_forward.1} parent=0 // pred_check_branch
    %15 = sbr.rel (0) target = $region13
  $region12: #{state_initializer_forward.1} parent=0 // pred_region
    _
  $region13: #{state_initializer_forward.1} parent=0 // pred_fallthru
    _
  // Predicated region
  $region14: #{state_initializer_forward.1} parent=0 // pred_check
    _
  $region15: #{state_initializer_forward.1} parent=0 // pred_check_branch
    %17 = sbr.rel (0) target = $region17
  $region16: #{state_initializer_forward.1} parent=0 // pred_region
    _
  $region17: #{state_initializer_forward.1} parent=0 // pred_fallthru
    _
  // Predicated region
  $region18: #{state_initializer_forward.1} parent=0 // pred_check
    _
  $region19: #{state_initializer_forward.1} parent=0 // pred_check_branch
    %19 = sbr.rel (0) target = $region21
  $region20: #{state_initializer_forward.1} parent=0 // pred_region
    _
  $region21: #{state_initializer_forward.1} parent=0 // pred_fallthru
    _
  %v23 = vld [vmem:[%s0] sm:$0xf]
  %v24 = vld [vmem:[%s0 + $0x4] sm:$0xf]
  %v25 = vld [vmem:[%s0 + $0x8] sm:$0xf]
  %v26 = vld [vmem:[%s0 + $0xc] sm:$0xf]
  %v27 = vlaneseq
  %v28 = vshrl.u32 %v27, 7
  %v29 = vadd.s32 %v28, 8
  %v30 = vadd.s32 %v28, 16
  %v31 = vadd.s32 %v28, 24
  %vm32 = vcmp.lt.s32.totalorder %v28, 0
  %v33 = vsub.s32 0, %v28
  %v34 = vsel %vm32, %v33, %v28
  %v35 = vshrl.u32 %v34, 4
  %v36 = vand.u32 %v34, 15
  %v37 = vsub.s32 0, %v36
  %v38 = vsel %vm32, %v37, %v36
  %vm39 = vcmp.lt.s32.totalorder %v29, 0
  %v40 = vsub.s32 0, %v29
  %v41 = vsel %vm39, %v40, %v29
  %v42 = vshrl.u32 %v41, 4
  %v43 = vand.u32 %v41, 15
  %v44 = vsub.s32 0, %v43
  %v45 = vsel %vm39, %v44, %v43
  %vm46 = vcmp.lt.s32.totalorder %v30, 0
  %v47 = vsub.s32 0, %v30
  %v48 = vsel %vm46, %v47, %v30
  %v49 = vshrl.u32 %v48, 4
  %v50 = vand.u32 %v48, 15
  %v51 = vsub.s32 0, %v50
  %v52 = vsel %vm46, %v51, %v50
  %vm53 = vcmp.lt.s32.totalorder %v31, 0
  %v54 = vsub.s32 0, %v31
  %v55 = vsel %vm53, %v54, %v31
  %v56 = vshrl.u32 %v55, 4
  %v57 = vand.u32 %v55, 15
  %v58 = vsub.s32 0, %v57
  %v59 = vsel %vm53, %v58, %v57
  %vm60 = vcmp.ne.s32.totalorder %v38, 0
  %vm61 = vcmp.ne.s32.totalorder %v45, 0
  %vm62 = vcmp.ne.s32.totalorder %v52, 0
  %vm63 = vcmp.ne.s32.totalorder %v59, 0
  %vm64 = vcmp.lt.s32.totalorder %v38, 0
  %vm65 = vcmp.lt.s32.totalorder %v45, 0
  %vm66 = vcmp.lt.s32.totalorder %v52, 0
  %vm67 = vcmp.lt.s32.totalorder %v59, 0
  %vm68 = vmand %vm64, %vm60
  %vm69 = vmand %vm65, %vm61
  %vm70 = vmand %vm66, %vm62
  %vm71 = vmand %vm67, %vm63
  %v72 = vadd.s32 %v38, 16
  %v73 = vadd.s32 %v45, 16
  %v74 = vadd.s32 %v52, 16
  %v75 = vadd.s32 %v59, 16
  %v76 = vsel %vm68, %v72, %v38
  %v77 = vsel %vm69, %v73, %v45
  %v78 = vsel %vm70, %v74, %v52
  %v79 = vsel %vm71, %v75, %v59
  %v80 = vadd.s32 %v76, 4294967295
  %v81 = vadd.s32 %v77, 4294967295
  %v82 = vadd.s32 %v78, 4294967295
  %v83 = vadd.s32 %v79, 4294967295
  %vm84 = vcmp.ge.s32.totalorder %v80, 0
  %vm85 = vcmp.ge.s32.totalorder %v81, 0
  %vm86 = vcmp.ge.s32.totalorder %v82, 0
  %vm87 = vcmp.ge.s32.totalorder %v83, 0
  %vm88 = vcmp.lt.s32.totalorder %v80, 16
  %vm89 = vcmp.lt.s32.totalorder %v81, 16
  %vm90 = vcmp.lt.s32.totalorder %v82, 16
  %vm91 = vcmp.lt.s32.totalorder %v83, 16
  %vm92 = vmand %vm84, %vm88
  %vm93 = vmand %vm85, %vm89
  %vm94 = vmand %vm86, %vm90
  %vm95 = vmand %vm87, %vm91
  %v96 = vadd.s32 %v76, 1
  %v97 = vadd.s32 %v77, 1
  %v98 = vadd.s32 %v78, 1
  %v99 = vadd.s32 %v79, 1
  %vm100 = vcmp.ge.s32.totalorder %v96, 0
  %vm101 = vcmp.ge.s32.totalorder %v97, 0
  %vm102 = vcmp.ge.s32.totalorder %v98, 0
  %vm103 = vcmp.ge.s32.totalorder %v99, 0
  %vm104 = vcmp.lt.s32.totalorder %v96, 16
  %vm105 = vcmp.lt.s32.totalorder %v97, 16
  %vm106 = vcmp.lt.s32.totalorder %v98, 16
  %vm107 = vcmp.lt.s32.totalorder %v99, 16
  %vm108 = vmand %vm100, %vm104
  %vm109 = vmand %vm101, %vm105
  %vm110 = vmand %vm102, %vm106
  %vm111 = vmand %vm103, %vm107
  %v116 = vunpack.c.l.b16 %v23
  %v117 = vunpack.c.l.b16 %v24
  %v118 = vunpack.c.l.b16 %v25
  %v119 = vunpack.c.l.b16 %v26
  %v120 = vpack.c.b16 %v117, %v116
  %v121 = vpack.c.b16 %v119, %v118
  %vm122 = vsmask.f32 256
  %v124 = vshrl.u32 %v120, 16
  %v126 = vrot.slane %v124, 7
  %v127 = vshll.u32 %v120, 16
  %v129 = vor.u32 %v126, %v127
  %v131 = vshrl.u32 %v121, 16
  %v133 = vrot.slane %v131, 7
  %v134 = vshll.u32 %v121, 16
  %v136 = vor.u32 %v133, %v134
  %v137 = vsel %vm122, %v126, %v136
  %vm140 = vcmask 1040384
  %vm141 = vmand %vm140, %vm122
  %v142 = vsel %vm141, 0, %v129
  %v143 = vsel %vm92, 1, 0
  %v144 = vsel %vm93, 1, 0
  %v145 = vsel %vm94, 1, 0
  %v146 = vsel %vm95, 1, 0
  %vm147 = vcmp.eq.s32.totalorder %v143, 1
  %vm148 = vcmp.eq.s32.totalorder %v144, 1
  %vm149 = vcmp.eq.s32.totalorder %v145, 1
  %vm150 = vcmp.eq.s32.totalorder %v146, 1
  %vm151 = vmpackc.low %vm147, %vm147
  %vm152 = vmpackc.low %vm148, %vm148
  %vm153 = vmpackc.low %vm149, %vm149
  %vm154 = vmpackc.low %vm150, %vm150
  %v155 = vsel %vm151, 65537, 0
  %v156 = vsel %vm152, 65537, 0
  %v157 = vsel %vm153, 65537, 0
  %v158 = vsel %vm154, 65537, 0
  %v159 = vunpack.c.l.b16 %v155
  %v160 = vunpack.c.l.b16 %v156
  %v161 = vunpack.c.l.b16 %v157
  %v162 = vunpack.c.l.b16 %v158
  %v163 = vpack.c.b16 %v160, %v159
  %v164 = vpack.c.b16 %v162, %v161
  %v165 = vunpack.c.l.b16 %v163
  %v166 = vunpack.c.h.b16 %v163
  %v167 = vunpack.c.l.b16 0
  %v168 = vunpack.c.h.b16 0
  %vm169 = vcmp.ne.s32.totalorder %v165, %v167
  %vm170 = vcmp.ne.s32.totalorder %v166, %v168
  %vm171 = vmpackc.low %vm170, %vm169
  %v172 = vunpack.c.l.b16 %v164
  %v173 = vunpack.c.h.b16 %v164
  %v174 = vunpack.c.l.b16 0
  %v175 = vunpack.c.h.b16 0
  %vm176 = vcmp.ne.s32.totalorder %v172, %v174
  %vm177 = vcmp.ne.s32.totalorder %v173, %v175
  %vm178 = vmpackc.low %vm177, %vm176
  %v179 = vsel %vm171, %v142, 0
  %v180 = vsel %vm178, %v137, 0
  %vm181 = vsmask.f32 7424
  %v182 = vrot.slane %v127, 1
  %v183 = vor.u32 %v124, %v182
  %v184 = vrot.slane %v134, 1
  %v185 = vsel %vm181, %v183, %v184
  %v186 = vor.u32 %v131, %v184
  %vm189 = vcmask 1047552
  %vm190 = vmand %vm189, %vm181
  %v191 = vsel %vm190, %v186, 0
  %v192 = vsel %vm108, 1, 0
  %v193 = vsel %vm109, 1, 0
  %v194 = vsel %vm110, 1, 0
  %v195 = vsel %vm111, 1, 0
  %vm196 = vcmp.eq.s32.totalorder %v192, 1
  %vm197 = vcmp.eq.s32.totalorder %v193, 1
  %vm198 = vcmp.eq.s32.totalorder %v194, 1
  %vm199 = vcmp.eq.s32.totalorder %v195, 1
  %vm200 = vmpackc.low %vm196, %vm196
  %vm201 = vmpackc.low %vm197, %vm197
  %vm202 = vmpackc.low %vm198, %vm198
  %vm203 = vmpackc.low %vm199, %vm199
  %v204 = vsel %vm200, 65537, 0
  %v205 = vsel %vm201, 65537, 0
  %v206 = vsel %vm202, 65537, 0
  %v207 = vsel %vm203, 65537, 0
  %v208 = vunpack.c.l.b16 %v204
  %v209 = vunpack.c.l.b16 %v205
  %v210 = vunpack.c.l.b16 %v206
  %v211 = vunpack.c.l.b16 %v207
  %v212 = vpack.c.b16 %v209, %v208
  %v213 = vpack.c.b16 %v211, %v210
  %v214 = vunpack.c.l.b16 %v212
  %v215 = vunpack.c.h.b16 %v212
  %v216 = vunpack.c.l.b16 0
  %v217 = vunpack.c.h.b16 0
  %vm218 = vcmp.ne.s32.totalorder %v214, %v216
  %vm219 = vcmp.ne.s32.totalorder %v215, %v217
  %vm220 = vmpackc.low %vm219, %vm218
  %v221 = vunpack.c.l.b16 %v213
  %v222 = vunpack.c.h.b16 %v213
  %v223 = vunpack.c.l.b16 0
  %v224 = vunpack.c.h.b16 0
  %vm225 = vcmp.ne.s32.totalorder %v221, %v223
  %vm226 = vcmp.ne.s32.totalorder %v222, %v224
  %vm227 = vmpackc.low %vm226, %vm225
  %v228 = vsel %vm220, %v185, 0
  %v229 = vsel %vm227, %v191, 0
  %230 = vrot.lane.b32.xlu0 %v120, 64
  %v231 = vpop.permute.xlu0 %230
  %232 = vrot.lane.b32.xlu0 %v121, 64
  %v233 = vpop.permute.xlu0 %232
  %vm234 = vcmask 523264
  %v237 = vsel %vm234, %v179, %v231
  %v241 = vsel %vm234, %v180, %v233
  %v243 = vld [vmem:[%s1] sm:$0xf]
  %v244 = vld [vmem:[%s1 + $0x4] sm:$0xf]
  %v245 = vld [vmem:[%s1 + $0x8] sm:$0xf]
  %v246 = vld [vmem:[%s1 + $0xc] sm:$0xf]
  %v247 = vld [vmem:[%s1 + $0x10] sm:$0xf]
  %v248 = vld [vmem:[%s1 + $0x14] sm:$0xf]
  %v249 = vld [vmem:[%s1 + $0x18] sm:$0xf]
  %v250 = vld [vmem:[%s1 + $0x1c] sm:$0xf]
  %v251 = vld [vmem:[%s1 + $0x20] sm:$0xf]
  %v252 = vld [vmem:[%s1 + $0x24] sm:$0xf]
  %v253 = vld [vmem:[%s1 + $0x28] sm:$0xf]
  %v254 = vld [vmem:[%s1 + $0x2c] sm:$0xf]
  %v255 = vld [vmem:[%s1 + $0x30] sm:$0xf]
  %v256 = vld [vmem:[%s1 + $0x34] sm:$0xf]
  %v257 = vld [vmem:[%s1 + $0x38] sm:$0xf]
  %v258 = vld [vmem:[%s1 + $0x3c] sm:$0xf]
  %v259 = vld [vmem:[%s1 + $0x40] sm:$0xf]
  %v260 = vld [vmem:[%s1 + $0x44] sm:$0xf]
  %v261 = vld [vmem:[%s1 + $0x48] sm:$0xf]
  %v262 = vld [vmem:[%s1 + $0x4c] sm:$0xf]
  %v263 = vld [vmem:[%s1 + $0x50] sm:$0xf]
  %v264 = vld [vmem:[%s1 + $0x54] sm:$0xf]
  %v265 = vld [vmem:[%s1 + $0x58] sm:$0xf]
  %v266 = vld [vmem:[%s1 + $0x5c] sm:$0xf]
  %v267 = vld [vmem:[%s2] sm:$0x1]
  %v269 = vperm.slane %v267, 0
  %v295 = vunpack.c.l.b16 %v243
  %v296 = vunpack.c.l.b16 %v244
  %v297 = vunpack.c.l.b16 %v245
  %v298 = vunpack.c.l.b16 %v246
  %v299 = vunpack.c.l.b16 %v247
  %v300 = vunpack.c.l.b16 %v248
  %v301 = vunpack.c.l.b16 %v249
  %v302 = vunpack.c.l.b16 %v250
  %v303 = vunpack.c.l.b16 %v251
  %v304 = vunpack.c.l.b16 %v252
  %v305 = vunpack.c.l.b16 %v253
  %v306 = vunpack.c.l.b16 %v254
  %v307 = vunpack.c.l.b16 %v255
  %v308 = vunpack.c.l.b16 %v256
  %v309 = vunpack.c.l.b16 %v257
  %v310 = vunpack.c.l.b16 %v258
  %v311 = vunpack.c.l.b16 %v259
  %v312 = vunpack.c.l.b16 %v260
  %v313 = vunpack.c.l.b16 %v261
  %v314 = vunpack.c.l.b16 %v262
  %v315 = vunpack.c.l.b16 %v263
  %v316 = vunpack.c.l.b16 %v264
  %v317 = vunpack.c.l.b16 %v265
  %v318 = vunpack.c.l.b16 %v266
  %v319 = vpack.c.b16 %v296, %v295
  %v320 = vpack.c.b16 %v298, %v297
  %v321 = vpack.c.b16 %v300, %v299
  %v322 = vpack.c.b16 %v302, %v301
  %v323 = vpack.c.b16 %v304, %v303
  %v324 = vpack.c.b16 %v306, %v305
  %v325 = vpack.c.b16 %v308, %v307
  %v326 = vpack.c.b16 %v310, %v309
  %v327 = vpack.c.b16 %v312, %v311
  %v328 = vpack.c.b16 %v314, %v313
  %v329 = vpack.c.b16 %v316, %v315
  %v330 = vpack.c.b16 %v318, %v317
  %v344 = vsel %vm234, %v228, 0
  %v347 = vsel %vm234, %v229, 0
  %349 = vmatpush.bf16.msra.mxu0 %v326
  %350 = vmatpush.bf16.msra.mxu0 %v325
  %351 = vmatpush.bf16.msra.mxu0 %v324
  %352 = vmatpush.bf16.msra.mxu0 %v323
  %353 = vmatpush.bf16.msra.mxu0 %v322
  %354 = vmatpush.bf16.msra.mxu0 %v321
  %355 = vmatpush.bf16.msra.mxu0 %v320
  %356 = vmatpush.bf16.msra.mxu0 %v319
  %357 = vmatmul.bf16.gmra.mxu0 %v237
  %v358 = vpop.f32.mrf.mxu0
  %v359 = vadd.f32 %v269, %v358
  %v360 = vpop.f32.mrf.mxu0
  %v361 = vadd.f32 %v269, %v360
  %362 = vmatmul.bf16.gmra.mxu0 %v241
  %v363 = vpop.f32.mrf.mxu0
  %v364 = vadd.f32 %v269, %v363
  %v365 = vpop.f32.mrf.mxu0
  %v366 = vadd.f32 %v269, %v365
  %367 = vdwg.mxu0
  %368 = vmatpush.bf16.msra.mxu0 0
  %369 = vmatpush.bf16.msra.mxu0 0
  %370 = vmatpush.bf16.msra.mxu0 0
  %371 = vmatpush.bf16.msra.mxu0 0
  %372 = vmatpush.bf16.msra.mxu0 %v330
  %373 = vmatpush.bf16.msra.mxu0 %v329
  %374 = vmatpush.bf16.msra.mxu0 %v328
  %375 = vmatpush.bf16.msra.mxu0 %v327
  %376 = vmatmul.bf16.gmra.mxu0 %v344
  %v377 = vpop.f32.mrf.mxu0
  %v378 = vadd.f32 %v359, %v377
  %v379 = vpop.f32.mrf.mxu0
  %v380 = vadd.f32 %v361, %v379
  %381 = vmatmul.bf16.gmra.mxu0 %v347
  %v382 = vpop.f32.mrf.mxu0
  %v383 = vadd.f32 %v364, %v382
  %v384 = vpop.f32.mrf.mxu0
  %v385 = vadd.f32 %v366, %v384
  %386 = vdwg.mxu0
  %vm387 = vcmp.gt.f32.partialorder %v378, 0.0
  %vm388 = vcmp.gt.f32.partialorder %v380, 0.0
  %vm389 = vcmp.gt.f32.partialorder %v383, 0.0
  %vm390 = vcmp.gt.f32.partialorder %v385, 0.0
  %v391 = vmul.f32 %v378, 0.1
  %v392 = vmul.f32 %v380, 0.1
  %v393 = vmul.f32 %v383, 0.1
  %v394 = vmul.f32 %v385, 0.1
  %v395 = vsel %vm387, %v378, %v391
  %v396 = vsel %vm388, %v380, %v392
  %v397 = vsel %vm389, %v383, %v393
  %v398 = vsel %vm390, %v385, %v394
  %v399 = vpack.c.bf16 %v395, %v395
  %v400 = vpack.c.bf16 %v396, %v396
  %v401 = vpack.c.bf16 %v397, %v397
  %v402 = vpack.c.bf16 %v398, %v398
  %v407 = vunpack.c.l.b16 %v399
  %v408 = vunpack.c.l.b16 %v400
  %v409 = vunpack.c.l.b16 %v401
  %v410 = vunpack.c.l.b16 %v402
  %v411 = vpack.c.b16 %v408, %v407
  %v412 = vpack.c.b16 %v410, %v409
  %v414 = vshrl.u32 %v411, 16
  %v416 = vrot.slane %v414, 7
  %v417 = vshll.u32 %v411, 16
  %v419 = vor.u32 %v416, %v417
  %v421 = vshrl.u32 %v412, 16
  %v423 = vrot.slane %v421, 7
  %v424 = vshll.u32 %v412, 16
  %v426 = vor.u32 %v423, %v424
  %v427 = vsel %vm122, %v416, %v426
  %v430 = vsel %vm141, 0, %v419
  %v431 = vsel %vm171, %v430, 0
  %v432 = vsel %vm178, %v427, 0
  %v433 = vrot.slane %v417, 1
  %v434 = vor.u32 %v414, %v433
  %v435 = vrot.slane %v424, 1
  %v436 = vsel %vm181, %v434, %v435
  %v437 = vor.u32 %v421, %v435
  %v440 = vsel %vm190, %v437, 0
  %v441 = vsel %vm220, %v436, 0
  %v442 = vsel %vm227, %v440, 0
  %v445 = vld [vmem:[%s3] sm:$0xf]
  %v446 = vld [vmem:[%s3 + $0x4] sm:$0xf]
  %v447 = vld [vmem:[%s3 + $0x8] sm:$0xf]
  %v448 = vld [vmem:[%s3 + $0xc] sm:$0xf]
  %v449 = vld [vmem:[%s3 + $0x10] sm:$0xf]
  %v450 = vld [vmem:[%s3 + $0x14] sm:$0xf]
  %v451 = vld [vmem:[%s3 + $0x18] sm:$0xf]
  %v452 = vld [vmem:[%s3 + $0x1c] sm:$0xf]
  %v453 = vld [vmem:[%s3 + $0x20] sm:$0xf]
  %v454 = vld [vmem:[%s3 + $0x24] sm:$0xf]
  %v455 = vld [vmem:[%s3 + $0x28] sm:$0xf]
  %v456 = vld [vmem:[%s3 + $0x2c] sm:$0xf]
  %v457 = vld [vmem:[%s3 + $0x30] sm:$0xf]
  %v458 = vld [vmem:[%s3 + $0x34] sm:$0xf]
  %v459 = vld [vmem:[%s3 + $0x38] sm:$0xf]
  %v460 = vld [vmem:[%s3 + $0x3c] sm:$0xf]
  %v461 = vld [vmem:[%s3 + $0x40] sm:$0xf]
  %v462 = vld [vmem:[%s3 + $0x44] sm:$0xf]
  %v463 = vld [vmem:[%s3 + $0x48] sm:$0xf]
  %v464 = vld [vmem:[%s3 + $0x4c] sm:$0xf]
  %v465 = vld [vmem:[%s3 + $0x50] sm:$0xf]
  %v466 = vld [vmem:[%s3 + $0x54] sm:$0xf]
  %v467 = vld [vmem:[%s3 + $0x58] sm:$0xf]
  %v468 = vld [vmem:[%s3 + $0x5c] sm:$0xf]
  %v469 = vld [vmem:[%s3 + $0x60] sm:$0xf]
  %v470 = vld [vmem:[%s3 + $0x64] sm:$0xf]
  %v471 = vld [vmem:[%s3 + $0x68] sm:$0xf]
  %v472 = vld [vmem:[%s3 + $0x6c] sm:$0xf]
  %v473 = vld [vmem:[%s3 + $0x70] sm:$0xf]
  %v474 = vld [vmem:[%s3 + $0x74] sm:$0xf]
  %v475 = vld [vmem:[%s3 + $0x78] sm:$0xf]
  %v476 = vld [vmem:[%s3 + $0x7c] sm:$0xf]
  %v477 = vld [vmem:[%s3 + $0x80] sm:$0xf]
  %v478 = vld [vmem:[%s3 + $0x84] sm:$0xf]
  %v479 = vld [vmem:[%s3 + $0x88] sm:$0xf]
  %v480 = vld [vmem:[%s3 + $0x8c] sm:$0xf]
  %v481 = vld [vmem:[%s3 + $0x90] sm:$0xf]
  %v482 = vld [vmem:[%s3 + $0x94] sm:$0xf]
  %v483 = vld [vmem:[%s3 + $0x98] sm:$0xf]
  %v484 = vld [vmem:[%s3 + $0x9c] sm:$0xf]
  %v485 = vld [vmem:[%s3 + $0xa0] sm:$0xf]
  %v486 = vld [vmem:[%s3 + $0xa4] sm:$0xf]
  %v487 = vld [vmem:[%s3 + $0xa8] sm:$0xf]
  %v488 = vld [vmem:[%s3 + $0xac] sm:$0xf]
  %v489 = vld [vmem:[%s3 + $0xb0] sm:$0xf]
  %v490 = vld [vmem:[%s3 + $0xb4] sm:$0xf]
  %v491 = vld [vmem:[%s3 + $0xb8] sm:$0xf]
  %v492 = vld [vmem:[%s3 + $0xbc] sm:$0xf]
  %v493 = vld [vmem:[%s4] sm:$0x1]
  %v495 = vperm.slane %v493, 0
  %v545 = vunpack.c.l.b16 %v445
  %v546 = vunpack.c.l.b16 %v446
  %v547 = vunpack.c.l.b16 %v447
  %v548 = vunpack.c.l.b16 %v448
  %v549 = vunpack.c.l.b16 %v449
  %v550 = vunpack.c.l.b16 %v450
  %v551 = vunpack.c.l.b16 %v451
  %v552 = vunpack.c.l.b16 %v452
  %v553 = vunpack.c.l.b16 %v453
  %v554 = vunpack.c.l.b16 %v454
  %v555 = vunpack.c.l.b16 %v455
  %v556 = vunpack.c.l.b16 %v456
  %v557 = vunpack.c.l.b16 %v457
  %v558 = vunpack.c.l.b16 %v458
  %v559 = vunpack.c.l.b16 %v459
  %v560 = vunpack.c.l.b16 %v460
  %v561 = vunpack.c.l.b16 %v461
  %v562 = vunpack.c.l.b16 %v462
  %v563 = vunpack.c.l.b16 %v463
  %v564 = vunpack.c.l.b16 %v464
  %v565 = vunpack.c.l.b16 %v465
  %v566 = vunpack.c.l.b16 %v466
  %v567 = vunpack.c.l.b16 %v467
  %v568 = vunpack.c.l.b16 %v468
  %v569 = vunpack.c.l.b16 %v469
  %v570 = vunpack.c.l.b16 %v470
  %v571 = vunpack.c.l.b16 %v471
  %v572 = vunpack.c.l.b16 %v472
  %v573 = vunpack.c.l.b16 %v473
  %v574 = vunpack.c.l.b16 %v474
  %v575 = vunpack.c.l.b16 %v475
  %v576 = vunpack.c.l.b16 %v476
  %v577 = vunpack.c.l.b16 %v477
  %v578 = vunpack.c.l.b16 %v478
  %v579 = vunpack.c.l.b16 %v479
  %v580 = vunpack.c.l.b16 %v480
  %v581 = vunpack.c.l.b16 %v481
  %v582 = vunpack.c.l.b16 %v482
  %v583 = vunpack.c.l.b16 %v483
  %v584 = vunpack.c.l.b16 %v484
  %v585 = vunpack.c.l.b16 %v485
  %v586 = vunpack.c.l.b16 %v486
  %v587 = vunpack.c.l.b16 %v487
  %v588 = vunpack.c.l.b16 %v488
  %v589 = vunpack.c.l.b16 %v489
  %v590 = vunpack.c.l.b16 %v490
  %v591 = vunpack.c.l.b16 %v491
  %v592 = vunpack.c.l.b16 %v492
  %v593 = vpack.c.b16 %v546, %v545
  %v594 = vpack.c.b16 %v548, %v547
  %v595 = vpack.c.b16 %v550, %v549
  %v596 = vpack.c.b16 %v552, %v551
  %v597 = vpack.c.b16 %v554, %v553
  %v598 = vpack.c.b16 %v556, %v555
  %v599 = vpack.c.b16 %v558, %v557
  %v600 = vpack.c.b16 %v560, %v559
  %v601 = vpack.c.b16 %v562, %v561
  %v602 = vpack.c.b16 %v564, %v563
  %v603 = vpack.c.b16 %v566, %v565
  %v604 = vpack.c.b16 %v568, %v567
  %v605 = vpack.c.b16 %v570, %v569
  %v606 = vpack.c.b16 %v572, %v571
  %v607 = vpack.c.b16 %v574, %v573
  %v608 = vpack.c.b16 %v576, %v575
  %v609 = vpack.c.b16 %v578, %v577
  %v610 = vpack.c.b16 %v580, %v579
  %v611 = vpack.c.b16 %v582, %v581
  %v612 = vpack.c.b16 %v584, %v583
  %v613 = vpack.c.b16 %v586, %v585
  %v614 = vpack.c.b16 %v588, %v587
  %v615 = vpack.c.b16 %v590, %v589
  %v616 = vpack.c.b16 %v592, %v591
  %641 = vmatpush.bf16.msra.mxu0 %v600
  %642 = vmatpush.bf16.msra.mxu0 %v599
  %643 = vmatpush.bf16.msra.mxu0 %v598
  %644 = vmatpush.bf16.msra.mxu0 %v597
  %645 = vmatpush.bf16.msra.mxu0 %v596
  %646 = vmatpush.bf16.msra.mxu0 %v595
  %647 = vmatpush.bf16.msra.mxu0 %v594
  %648 = vmatpush.bf16.msra.mxu0 %v593
  %649 = vmatmul.bf16.gmra.mxu0 %v431
  %v650 = vpop.f32.mrf.mxu0
  %v651 = vadd.f32 %v495, %v650
  %v652 = vpop.f32.mrf.mxu0
  %v653 = vadd.f32 %v495, %v652
  %654 = vmatmul.bf16.gmra.mxu0 %v432
  %v655 = vpop.f32.mrf.mxu0
  %v656 = vadd.f32 %v495, %v655
  %v657 = vpop.f32.mrf.mxu0
  %v658 = vadd.f32 %v495, %v657
  %659 = vdwg.mxu0
  %660 = vmatpush.bf16.msra.mxu0 %v608
  %661 = vmatpush.bf16.msra.mxu0 %v607
  %662 = vmatpush.bf16.msra.mxu0 %v606
  %663 = vmatpush.bf16.msra.mxu0 %v605
  %664 = vmatpush.bf16.msra.mxu0 %v604
  %665 = vmatpush.bf16.msra.mxu0 %v603
  %666 = vmatpush.bf16.msra.mxu0 %v602
  %667 = vmatpush.bf16.msra.mxu0 %v601
  %668 = vmatmul.bf16.gmra.mxu0 %v411
  %v669 = vpop.f32.mrf.mxu0
  %v670 = vadd.f32 %v651, %v669
  %v671 = vpop.f32.mrf.mxu0
  %v672 = vadd.f32 %v653, %v671
  %673 = vmatmul.bf16.gmra.mxu0 %v412
  %v674 = vpop.f32.mrf.mxu0
  %v675 = vadd.f32 %v656, %v674
  %v676 = vpop.f32.mrf.mxu0
  %v677 = vadd.f32 %v658, %v676
  %678 = vdwg.mxu0
  %679 = vmatpush.bf16.msra.mxu0 %v616
  %680 = vmatpush.bf16.msra.mxu0 %v615
  %681 = vmatpush.bf16.msra.mxu0 %v614
  %682 = vmatpush.bf16.msra.mxu0 %v613
  %683 = vmatpush.bf16.msra.mxu0 %v612
  %684 = vmatpush.bf16.msra.mxu0 %v611
  %685 = vmatpush.bf16.msra.mxu0 %v610
  %686 = vmatpush.bf16.msra.mxu0 %v609
  %687 = vmatmul.bf16.gmra.mxu0 %v441
  %v688 = vpop.f32.mrf.mxu0
  %v689 = vadd.f32 %v670, %v688
  %v690 = vpop.f32.mrf.mxu0
  %v691 = vadd.f32 %v672, %v690
  %692 = vmatmul.bf16.gmra.mxu0 %v442
  %v693 = vpop.f32.mrf.mxu0
  %v694 = vadd.f32 %v675, %v693
  %v695 = vpop.f32.mrf.mxu0
  %v696 = vadd.f32 %v677, %v695
  %697 = vdwg.mxu0
  %698 = vst [vmem:[%s5] sm:$0xff] %v689
  %699 = vst [vmem:[%s5 + $0x8] sm:$0xff] %v691
  %700 = vst [vmem:[%s5 + $0x10] sm:$0xff] %v694
  %701 = vst [vmem:[%s5 + $0x18] sm:$0xff] %v696
  // Predicated region
  $region22: #{state_initializer_forward.1} parent=0 // pred_check
    _
  $region23: #{state_initializer_forward.1} parent=0 // pred_check_branch
    %703 = sbr.rel (0) target = $region25
  $region24: #{state_initializer_forward.1} parent=0 // pred_region
    _
  $region25: #{state_initializer_forward.1} parent=0 // pred_fallthru
    _
  // Predicated region
  $region26: #{state_initializer_forward.1} parent=0 // pred_check
    _
  $region27: #{state_initializer_forward.1} parent=0 // pred_check_branch
    %705 = sbr.rel (0) target = $region29
  $region28: #{state_initializer_forward.1} parent=0 // pred_region
    _
  $region29: #{state_initializer_forward.1} parent=0 // pred_fallthru
    _

</llo_original>
